<compile_context>
chip_gen: v5e
topology: v5e:2x2
jax: 0.10.0
libtpu: 0.0.40
codegen_flags: <defaults>
</compile_context>

<pallas_src>
import functools

import jax
import jax.numpy as jnp
from jax.experimental import pallas as pl
from jax.experimental.pallas import tpu as pltpu

_HEADS = 4      # r, g, b, a
_LANE = 128
_SUBLANE = 8


def _round_up(x, m):
    return (x + m - 1) // m * m


def _vmem_capacity_bytes():
    try:
        return int(pltpu.get_tpu_info().vmem_capacity_bytes)
    except Exception:
        return 128 << 20   # v5e / v6e physical VMEM


def _pick_tile(n, tm):
    """Pick the lane-tile (batch chunk).

    Per grid step this kernel moves only ~30 B/lane of HBM traffic, so the
    ~0.35 us fixed step overhead dominates unless the tile is large.  Live
    VMEM is ~1.3 KB/lane (f32/bf16 intermediates + double-buffered I/O), so
    the tile is capped at ~60% of VMEM capacity (generation aware: 64 MiB on
    v7x, 128 MiB on v5e/v6e)."""
    vmem = _vmem_capacity_bytes()
    bytes_per_lane = 1400                       # conservative live-VMEM estimate
    cap = max(_LANE, (int(0.6 * vmem) // bytes_per_lane) // _LANE * _LANE)
    if tm is None:
        tm = 32768 if vmem >= (96 << 20) else 16384
    tile = min(_round_up(tm, _LANE), cap)
    n_lanes = _round_up(max(n, 1), _LANE)
    tile = min(tile, n_lanes)
    # Keep >= 2 grid steps when possible so both v7x TensorCores get work.
    if n_lanes >= 2 * _LANE and tile >= n_lanes:
        tile = _round_up((n_lanes + 1) // 2, _LANE)
    return tile


def _rgba_kernel(x_ref, w1_ref, b1_ref, w2_ref, b2_ref, wh_ref, bh_ref, out_ref):
    # x   : (d_in_pad, tile) bf16   w1: (128, d_in_pad) bf16   b1: (128, 1) f32
    # w2  : (64, 128) bf16          b2: (64, 1) f32
    # wh  : (4, 64) bf16            bh: (4, 1) f32
    # out : (4, tile) f32           rows = r, g, b, a ; lane-dense stores
    h1 = jnp.dot(w1_ref[...], x_ref[...], preferred_element_type=jnp.float32)
    h1 = jnp.maximum(h1 + b1_ref[...], 0.0)                       # relu(fc1), f32
    h2 = jnp.dot(w2_ref[...], h1.astype(w2_ref.dtype),
                 preferred_element_type=jnp.float32)
    h2 = jnp.maximum(h2 + b2_ref[...], 0.0)                       # relu(fc2), f32
    out_ref[...] = (
        jnp.dot(wh_ref[...], h2.astype(wh_ref.dtype),
                preferred_element_type=jnp.float32)
        + bh_ref[...]
    )


@functools.partial(jax.jit, static_argnames=("tm",))
def rgba_forward_slab(density, heading, params, *, tm=None):
    """Runs the MLP; returns a (4, n_pad) f32 slab (rows r, g, b, a).

    Columns >= N are padding junk.  No post-kernel HBM epilogue — preferred
    entry point for downstream consumers."""
    w1, b1, w2, b2, wh, bh = params
    n, dd = density.shape
    d_in = dd + heading.shape[1]
    d_in_pad = w1.shape[1]
    assert d_in_pad >= d_in

    tile = _pick_tile(n, tm)
    n_pad = _round_up(max(n, 1), tile)

    # One fused pre-pass: concat + cast + pad + transpose -> (d_in_pad, n_pad) bf16.
    # TODO(synk): if the producer can hand over (d_in, N) bf16 directly, drop this.
    x = jnp.concatenate([density, heading], axis=1).astype(jnp.bfloat16)
    x = jnp.pad(x, ((0, n_pad - n), (0, d_in_pad - d_in)))
    x_t = x.T                                                     # (d_in_pad, n_pad)

    weight_bytes = sum(int(p.size) * p.dtype.itemsize for p in params)
    cost = pl.CostEstimate(
        flops=2 * n_pad * (d_in_pad * 128 + 128 * 64 + 64 * _HEADS),
        transcendentals=0,
        bytes_accessed=n_pad * (d_in_pad * 2 + _HEADS * 4) + weight_bytes,
    )

    # Raise scoped VMEM above the 16 MiB (v5e) / 32 MiB (v6e/v7x) defaults so
    # the large batch tile fits, while leaving headroom on 64 MiB v7x parts.
    vmem_limit = min(int(0.8 * _vmem_capacity_bytes()), 100 << 20)

    out = pl.pallas_call(
        _rgba_kernel,
        out_shape=jax.ShapeDtypeStruct((_HEADS, n_pad), jnp.float32),
        grid=(n_pad // tile,),
        in_specs=[
            pl.BlockSpec((d_in_pad, tile), lambda i: (0, i)),   # activations
            pl.BlockSpec((128, d_in_pad), lambda i: (0, 0)),    # fc1 weight (resident)
            pl.BlockSpec((128, 1), lambda i: (0, 0)),           # fc1 bias
            pl.BlockSpec((64, 128), lambda i: (0, 0)),          # fc2 weight
            pl.BlockSpec((64, 1), lambda i: (0, 0)),            # fc2 bias
            pl.BlockSpec((_HEADS, 64), lambda i: (0, 0)),       # fused head weight
            pl.BlockSpec((_HEADS, 1), lambda i: (0, 0)),        # fused head bias
        ],
        out_specs=pl.BlockSpec((_HEADS, tile), lambda i: (0, i)),
        compiler_params=pltpu.CompilerParams(
            dimension_semantics=("parallel",),
            vmem_limit_bytes=vmem_limit,
        ),
        cost_estimate=cost,
    )(x_t, w1, b1, w2, b2, wh, bh)
    return out


def rgba_forward(density, heading, params, *, tm=None):
    """PyTorch-compatible signature: returns (r, g, b, a), each (N, 1) f32.

    Prefer rgba_forward_slab() downstream to avoid this extra output pass."""
    n = density.shape[0]
    out = rgba_forward_slab(density, heading, params, tm=tm)[:, :n]   # (4, n)
    r, g, b, a = jnp.split(out.T, _HEADS, axis=1)                     # each (n, 1)
    return r, g, b, a


def init_params(key, density_dim):
    """nn.Linear-style init.  Weights kept in PyTorch (out, in) orientation
    (exactly what the transposed kernel wants).  fc1 is a single merged weight
    zero-padded along the input dim to a sublane multiple; the four 1-row heads
    are fused into one (4, 64) weight.  MXU operands bf16, biases f32."""
    d_in = density_dim + 2
    d_in_pad = max(_SUBLANE, _round_up(d_in, _SUBLANE))
    ks = jax.random.split(key, 12)

    def linear(kw, kb, fan_in, fan_out):
        bound = float(fan_in) ** -0.5
        w = jax.random.uniform(kw, (fan_out, fan_in), jnp.float32, -bound, bound)
        b = jax.random.uniform(kb, (fan_out, 1), jnp.float32, -bound, bound)
        return w, b

    w1, b1 = linear(ks[0], ks[1], d_in, 128)
    w2, b2 = linear(ks[2], ks[3], 128, 64)
    wr, br = linear(ks[4], ks[5], 64, 1)
    wg, bg = linear(ks[6], ks[7], 64, 1)
    wb, bb = linear(ks[8], ks[9], 64, 1)
    wa, ba = linear(ks[10], ks[11], 64, 1)

    w1p = jnp.pad(w1, ((0, 0), (0, d_in_pad - d_in)))        # (128, d_in_pad)
    wh = jnp.concatenate([wr, wg, wb, wa], axis=0)           # (4, 64)
    bh = jnp.concatenate([br, bg, bb, ba], axis=0)           # (4, 1)

    bf16 = lambda x: x.astype(jnp.bfloat16)
    return (bf16(w1p), b1, bf16(w2), b2, bf16(wh), bh)


def _reference_bf16(density, heading, params):
    """Pure-JAX reference matching the kernel's bf16-operand / f32-accumulate math."""
    w1, b1, w2, b2, wh, bh = params
    f32 = lambda x: x.astype(jnp.float32)
    n, dd = density.shape
    d_in = dd + heading.shape[1]
    x = jnp.concatenate([density, heading], axis=1).astype(jnp.bfloat16)
    x_t = f32(x).T                                            # (d_in, n)
    h1 = jnp.maximum(f32(w1)[:, :d_in] @ x_t + b1, 0.0)
    h1 = f32(h1.astype(jnp.bfloat16))
    h2 = jnp.maximum(f32(w2) @ h1 + b2, 0.0)
    h2 = f32(h2.astype(jnp.bfloat16))
    out = f32(wh) @ h2 + bh                                   # (4, n)
    return tuple(out[i].reshape(n, 1) for i in range(4))


def _reference_f32(density, heading, params):
    """True f32 semantics (as the PyTorch module computes); loose-tolerance check
    for the deliberate bf16 MXU-operand approximation in the kernel."""
    w1, b1, w2, b2, wh, bh = params
    f32 = lambda x: x.astype(jnp.float32)
    n, dd = density.shape
    d_in = dd + heading.shape[1]
    x_t = jnp.concatenate([density, heading], axis=1).astype(jnp.float32).T
    h1 = jnp.maximum(f32(w1)[:, :d_in] @ x_t + b1, 0.0)
    h2 = jnp.maximum(f32(w2) @ h1 + b2, 0.0)
    out = f32(wh) @ h2 + bh
    return tuple(out[i].reshape(n, 1) for i in range(4))


if __name__ == "__main__":
    key = jax.random.PRNGKey(0)
    density_dim = 6
    batch = 8

    k_p, k_d, k_h = jax.random.split(key, 3)
    params = init_params(k_p, density_dim)
    density = jax.random.normal(k_d, (batch, density_dim), jnp.float32)
    heading = jax.random.normal(k_h, (batch, 2), jnp.float32)

    # Preferred slab entry point (no post-kernel HBM epilogue).
    slab = rgba_forward_slab(density, heading, params)
    jax.block_until_ready(slab)

    # PyTorch-compatible tuple entry point.
    r, g, b, a = rgba_forward(density, heading, params)
    jax.block_until_ready((r, g, b, a))

    refs_bf16 = _reference_bf16(density, heading, params)
    refs_f32 = _reference_f32(density, heading, params)
    for got, want_bf16, want_f32 in zip((r, g, b, a), refs_bf16, refs_f32):
        assert got.shape == (batch, 1)
        assert jnp.allclose(got, want_bf16, atol=1e-3, rtol=1e-3), (
            float(jnp.max(jnp.abs(got - want_bf16))))
        # Loose check against full-f32 semantics (kernel uses bf16 MXU operands).
        assert jnp.allclose(got, want_f32, atol=5e-2, rtol=5e-2), (
            float(jnp.max(jnp.abs(got - want_f32))))

    # Slab rows must agree with the tuple outputs.
    slab_valid = slab[:, :batch]
    for i, got in enumerate((r, g, b, a)):
        assert jnp.allclose(slab_valid[i].reshape(batch, 1), got)

    print("KERNEL_OK")
</pallas_src>

<mosaic_0001>
module attributes {stable_mosaic.version = 11 : i64} {
  func.func @_rgba_kernel(%arg0: i32, %arg1: memref<8x128xbf16, #tpu.memory_space<vmem>>, %arg2: memref<128x8xbf16, #tpu.memory_space<vmem>>, %arg3: memref<128x1xf32, #tpu.memory_space<vmem>>, %arg4: memref<64x128xbf16, #tpu.memory_space<vmem>>, %arg5: memref<64x1xf32, #tpu.memory_space<vmem>>, %arg6: memref<4x64xbf16, #tpu.memory_space<vmem>>, %arg7: memref<4x1xf32, #tpu.memory_space<vmem>>, %arg8: memref<4x128xf32, #tpu.memory_space<vmem>>) attributes {dimension_semantics = [#tpu.dimension_semantics<parallel>], iteration_bounds = array<i64: 1>, scalar_prefetch = 0 : i64, scratch_operands = 0 : i64, tpu.core_type = #tpu.core_type<tc>, window_params = [{transform_indices = @transform_0, window_bounds = array<i64: 8, 128>}, {pipeline_mode = #tpu.pipeline_mode<synchronous>, transform_indices = @transform_1, window_bounds = array<i64: 128, 8>}, {pipeline_mode = #tpu.pipeline_mode<synchronous>, transform_indices = @transform_2, window_bounds = array<i64: 128, 1>}, {pipeline_mode = #tpu.pipeline_mode<synchronous>, transform_indices = @transform_3, window_bounds = array<i64: 64, 128>}, {pipeline_mode = #tpu.pipeline_mode<synchronous>, transform_indices = @transform_4, window_bounds = array<i64: 64, 1>}, {pipeline_mode = #tpu.pipeline_mode<synchronous>, transform_indices = @transform_5, window_bounds = array<i64: 4, 64>}, {pipeline_mode = #tpu.pipeline_mode<synchronous>, transform_indices = @transform_6, window_bounds = array<i64: 4, 1>}, {transform_indices = @transform_7, window_bounds = array<i64: 4, 128>}]} {
    %c0 = arith.constant 0 : index
    %c0_0 = arith.constant 0 : index
    %0 = vector.load %arg2[%c0, %c0_0] : memref<128x8xbf16, #tpu.memory_space<vmem>>, vector<128x8xbf16>
    %c0_1 = arith.constant 0 : index
    %c0_2 = arith.constant 0 : index
    %1 = vector.load %arg1[%c0_1, %c0_2] : memref<8x128xbf16, #tpu.memory_space<vmem>>, vector<8x128xbf16>
    %cst = arith.constant dense<0.000000e+00> : vector<128x128xf32>
    %2 = tpu.matmul %0, %1, %cst {dimension_numbers = #tpu.dot_dimension_numbers<[1], [0], [0], [1], [0, 0, 1, 1], [], []>} : vector<128x8xbf16>, vector<8x128xbf16>, vector<128x128xf32> -> vector<128x128xf32>
    %c0_3 = arith.constant 0 : index
    %c0_4 = arith.constant 0 : index
    %3 = vector.load %arg3[%c0_3, %c0_4] : memref<128x1xf32, #tpu.memory_space<vmem>>, vector<128x1xf32>
    %4 = vector.broadcast %3 : vector<128x1xf32> to vector<128x128xf32>
    %5 = arith.addf %2, %4 : vector<128x128xf32>
    %cst_5 = arith.constant 0.000000e+00 : f32
    %6 = vector.broadcast %cst_5 : f32 to vector<128x128xf32>
    %7 = arith.maximumf %5, %6 : vector<128x128xf32>
    %c0_6 = arith.constant 0 : index
    %c0_7 = arith.constant 0 : index
    %8 = vector.load %arg4[%c0_6, %c0_7] : memref<64x128xbf16, #tpu.memory_space<vmem>>, vector<64x128xbf16>
    %9 = arith.truncf %7 : vector<128x128xf32> to vector<128x128xbf16>
    %cst_8 = arith.constant dense<0.000000e+00> : vector<64x128xf32>
    %10 = tpu.matmul %8, %9, %cst_8 {dimension_numbers = #tpu.dot_dimension_numbers<[1], [0], [0], [1], [0, 0, 1, 1], [], []>} : vector<64x128xbf16>, vector<128x128xbf16>, vector<64x128xf32> -> vector<64x128xf32>
    %c0_9 = arith.constant 0 : index
    %c0_10 = arith.constant 0 : index
    %11 = vector.load %arg5[%c0_9, %c0_10] : memref<64x1xf32, #tpu.memory_space<vmem>>, vector<64x1xf32>
    %12 = vector.broadcast %11 : vector<64x1xf32> to vector<64x128xf32>
    %13 = arith.addf %10, %12 : vector<64x128xf32>
    %cst_11 = arith.constant 0.000000e+00 : f32
    %14 = vector.broadcast %cst_11 : f32 to vector<64x128xf32>
    %15 = arith.maximumf %13, %14 : vector<64x128xf32>
    %c0_12 = arith.constant 0 : index
    %c0_13 = arith.constant 0 : index
    %16 = vector.load %arg6[%c0_12, %c0_13] : memref<4x64xbf16, #tpu.memory_space<vmem>>, vector<4x64xbf16>
    %17 = arith.truncf %15 : vector<64x128xf32> to vector<64x128xbf16>
    %cst_14 = arith.constant dense<0.000000e+00> : vector<4x128xf32>
    %18 = tpu.matmul %16, %17, %cst_14 {dimension_numbers = #tpu.dot_dimension_numbers<[1], [0], [0], [1], [0, 0, 1, 1], [], []>} : vector<4x64xbf16>, vector<64x128xbf16>, vector<4x128xf32> -> vector<4x128xf32>
    %c0_15 = arith.constant 0 : index
    %c0_16 = arith.constant 0 : index
    %19 = vector.load %arg7[%c0_15, %c0_16] : memref<4x1xf32, #tpu.memory_space<vmem>>, vector<4x1xf32>
    %20 = vector.broadcast %19 : vector<4x1xf32> to vector<4x128xf32>
    %21 = arith.addf %18, %20 : vector<4x128xf32>
    %c0_17 = arith.constant 0 : index
    %c0_18 = arith.constant 0 : index
    %22 = vector.load %arg8[%c0_17, %c0_18] : memref<4x128xf32, #tpu.memory_space<vmem>>, vector<4x128xf32>
    tpu.vector_store %arg8[%c0_17, %c0_18], %21 {strides = array<i32>} : memref<4x128xf32, #tpu.memory_space<vmem>>, vector<4x128xf32>,
    return
  }
  func.func @transform_0(%arg0: i32) -> (i32, i32) {
    %c0_i32 = arith.constant 0 : i32
    %c0_i32_0 = arith.constant 0 : i32
    return %c0_i32, %arg0 : i32, i32
  }
  func.func @transform_1(%arg0: i32) -> (i32, i32) {
    %c0_i32 = arith.constant 0 : i32
    %c0_i32_0 = arith.constant 0 : i32
    %c0_i32_1 = arith.constant 0 : i32
    return %c0_i32, %c0_i32_0 : i32, i32
  }
  func.func @transform_2(%arg0: i32) -> (i32, i32) {
    %c0_i32 = arith.constant 0 : i32
    %c0_i32_0 = arith.constant 0 : i32
    %c0_i32_1 = arith.constant 0 : i32
    return %c0_i32, %c0_i32_0 : i32, i32
  }
  func.func @transform_3(%arg0: i32) -> (i32, i32) {
    %c0_i32 = arith.constant 0 : i32
    %c0_i32_0 = arith.constant 0 : i32
    %c0_i32_1 = arith.constant 0 : i32
    return %c0_i32, %c0_i32_0 : i32, i32
  }
  func.func @transform_4(%arg0: i32) -> (i32, i32) {
    %c0_i32 = arith.constant 0 : i32
    %c0_i32_0 = arith.constant 0 : i32
    %c0_i32_1 = arith.constant 0 : i32
    return %c0_i32, %c0_i32_0 : i32, i32
  }
  func.func @transform_5(%arg0: i32) -> (i32, i32) {
    %c0_i32 = arith.constant 0 : i32
    %c0_i32_0 = arith.constant 0 : i32
    %c0_i32_1 = arith.constant 0 : i32
    return %c0_i32, %c0_i32_0 : i32, i32
  }
  func.func @transform_6(%arg0: i32) -> (i32, i32) {
    %c0_i32 = arith.constant 0 : i32
    %c0_i32_0 = arith.constant 0 : i32
    %c0_i32_1 = arith.constant 0 : i32
    return %c0_i32, %c0_i32_0 : i32, i32
  }
  func.func @transform_7(%arg0: i32) -> (i32, i32) {
    %c0_i32 = arith.constant 0 : i32
    %c0_i32_0 = arith.constant 0 : i32
    return %c0_i32, %arg0 : i32, i32
  }
}

</mosaic_0001>

<llo_original>
// kernel: rgba_forward_slab.1
$region0: #{rgba_forward_slab.1}
  #allocation0 [shape = 'u32[]', space=smem, size = 0x4, offset = 0x4, fixed_abs, tag = 'smem constant byte address 0x4 - core index']
  #allocation1 [shape = 'u32[72,128]{1,0:T(1,128)}', space=vmem, size = 0x9000, scoped, tag = 'internal scratch']
  %s0 = inlined_call_operand.vmem [shape: bf16[8,128], index: 0, kind: input, shape index: {}]
  %s1 = inlined_call_operand.vmem [shape: bf16[128,8], index: 1, kind: input, shape index: {}]
  %s2 = inlined_call_operand.vmem [shape: f32[128,1], index: 2, kind: input, shape index: {}]
  %s3 = inlined_call_operand.vmem [shape: bf16[64,128], index: 3, kind: input, shape index: {}]
  %s4 = inlined_call_operand.vmem [shape: f32[64,1], index: 4, kind: input, shape index: {}]
  %s5 = inlined_call_operand.vmem [shape: bf16[4,64], index: 5, kind: input, shape index: {}]
  %s6 = inlined_call_operand.vmem [shape: f32[4,1], index: 6, kind: input, shape index: {}]
  %s7 = inlined_call_operand.hbm [shape: f32[4,128], index: 7, kind: output, shape index: {}]
  %s8 = sld [smem:[#allocation0]]
  $region38: #{rgba_forward_slab.1} parent=0
    _
  %s10 = ssub.s32 1, %s8
  %s11 = scalar_select 0, %s10, %s8
  $region1: #{rgba_forward_slab.1} parent=0
    #allocation2 [shape = 'u8[2048]{0}', space=vmem, size = 0x800, scoped, tag = 'output window, operand 0, single buffered']
    #allocation3 [shape = 's32[1]{0}', space=sflag, size = 0x4, scoped, tag = 'scoped memory for rgba_forward_slab.1']
    %12 = vsyncpa [#allocation3], 0
    // Predicated region
    $region2: #{rgba_forward_slab.1} parent=1 // pred_check
      _
    $region3: #{rgba_forward_slab.1} parent=1 // pred_check_branch
      %14 = sbr.rel (0) target = $region5
    $region4: #{rgba_forward_slab.1} parent=1 // pred_region
      _
    $region5: #{rgba_forward_slab.1} parent=1 // pred_fallthru
      _
    // Predicated region
    $region6: #{rgba_forward_slab.1} parent=1 // pred_check
      _
    $region7: #{rgba_forward_slab.1} parent=1 // pred_check_branch
      %16 = sbr.rel (0) target = $region9
    $region8: #{rgba_forward_slab.1} parent=1 // pred_region
      _
    $region9: #{rgba_forward_slab.1} parent=1 // pred_fallthru
      _
    // Predicated region
    $region10: #{rgba_forward_slab.1} parent=1 // pred_check
      _
    $region11: #{rgba_forward_slab.1} parent=1 // pred_check_branch
      %18 = sbr.rel (0) target = $region13
    $region12: #{rgba_forward_slab.1} parent=1 // pred_region
      _
    $region13: #{rgba_forward_slab.1} parent=1 // pred_fallthru
      _
    // Predicated region
    $region14: #{rgba_forward_slab.1} parent=1 // pred_check
      _
    $region15: #{rgba_forward_slab.1} parent=1 // pred_check_branch
      %20 = sbr.rel (0) target = $region17
    $region16: #{rgba_forward_slab.1} parent=1 // pred_region
      _
    $region17: #{rgba_forward_slab.1} parent=1 // pred_fallthru
      _
    // Predicated region
    $region18: #{rgba_forward_slab.1} parent=1 // pred_check
      _
    $region19: #{rgba_forward_slab.1} parent=1 // pred_check_branch
      %22 = sbr.rel (0) target = $region21
    $region20: #{rgba_forward_slab.1} parent=1 // pred_region
      _
    $region21: #{rgba_forward_slab.1} parent=1 // pred_fallthru
      _
    // Predicated region
    $region22: #{rgba_forward_slab.1} parent=1 // pred_check
      _
    $region23: #{rgba_forward_slab.1} parent=1 // pred_check_branch
      %24 = sbr.rel (0) target = $region25
    $region24: #{rgba_forward_slab.1} parent=1 // pred_region
      _
    $region25: #{rgba_forward_slab.1} parent=1 // pred_fallthru
      _
    // Predicated region
    $region26: #{rgba_forward_slab.1} parent=1 // pred_check
      _
    $region27: #{rgba_forward_slab.1} parent=1 // pred_check_branch
      %26 = sbr.rel (0) target = $region29
    $region28: #{rgba_forward_slab.1} parent=1 // pred_region
      _
    $region29: #{rgba_forward_slab.1} parent=1 // pred_fallthru
      _
    %v28 = vld [vmem:[%s1] sm:$0xf]
    %v29 = vld [vmem:[%s1 + $0x4] sm:$0xf]
    %v30 = vld [vmem:[%s1 + $0x8] sm:$0xf]
    %v31 = vld [vmem:[%s1 + $0xc] sm:$0xf]
    %v32 = vld [vmem:[%s1 + $0x10] sm:$0xf]
    %v33 = vld [vmem:[%s1 + $0x14] sm:$0xf]
    %v34 = vld [vmem:[%s1 + $0x18] sm:$0xf]
    %v35 = vld [vmem:[%s1 + $0x1c] sm:$0xf]
    %v36 = vld [vmem:[%s1 + $0x20] sm:$0xf]
    %v37 = vld [vmem:[%s1 + $0x24] sm:$0xf]
    %v38 = vld [vmem:[%s1 + $0x28] sm:$0xf]
    %v39 = vld [vmem:[%s1 + $0x2c] sm:$0xf]
    %v40 = vld [vmem:[%s1 + $0x30] sm:$0xf]
    %v41 = vld [vmem:[%s1 + $0x34] sm:$0xf]
    %v42 = vld [vmem:[%s1 + $0x38] sm:$0xf]
    %v43 = vld [vmem:[%s1 + $0x3c] sm:$0xf]
    %v44 = vld [vmem:[%s0] sm:$0xf]
    %v45 = vld [vmem:[%s2] sm:$0xff]
    %v46 = vld [vmem:[%s2 + $0x8] sm:$0xff]
    %v47 = vld [vmem:[%s2 + $0x10] sm:$0xff]
    %v48 = vld [vmem:[%s2 + $0x18] sm:$0xff]
    %v49 = vld [vmem:[%s2 + $0x20] sm:$0xff]
    %v50 = vld [vmem:[%s2 + $0x28] sm:$0xff]
    %v51 = vld [vmem:[%s2 + $0x30] sm:$0xff]
    %v52 = vld [vmem:[%s2 + $0x38] sm:$0xff]
    %v53 = vld [vmem:[%s2 + $0x40] sm:$0xff]
    %v54 = vld [vmem:[%s2 + $0x48] sm:$0xff]
    %v55 = vld [vmem:[%s2 + $0x50] sm:$0xff]
    %v56 = vld [vmem:[%s2 + $0x58] sm:$0xff]
    %v57 = vld [vmem:[%s2 + $0x60] sm:$0xff]
    %v58 = vld [vmem:[%s2 + $0x68] sm:$0xff]
    %v59 = vld [vmem:[%s2 + $0x70] sm:$0xff]
    %v60 = vld [vmem:[%s2 + $0x78] sm:$0xff]
    %62 = vset.pattern.permute.xlu0 0
    %63 = vperm.xlu0 %62, %v45
    %v64 = vpop.permute.xlu0 %63
    %67 = vset.pattern.permute.xlu0 0
    %68 = vperm.xlu0 %67, %v46
    %v69 = vpop.permute.xlu0 %68
    %72 = vset.pattern.permute.xlu0 0
    %73 = vperm.xlu0 %72, %v47
    %v74 = vpop.permute.xlu0 %73
    %77 = vset.pattern.permute.xlu0 0
    %78 = vperm.xlu0 %77, %v48
    %v79 = vpop.permute.xlu0 %78
    %82 = vset.pattern.permute.xlu0 0
    %83 = vperm.xlu0 %82, %v49
    %v84 = vpop.permute.xlu0 %83
    %87 = vset.pattern.permute.xlu0 0
    %88 = vperm.xlu0 %87, %v50
    %v89 = vpop.permute.xlu0 %88
    %92 = vset.pattern.permute.xlu0 0
    %93 = vperm.xlu0 %92, %v51
    %v94 = vpop.permute.xlu0 %93
    %97 = vset.pattern.permute.xlu0 0
    %98 = vperm.xlu0 %97, %v52
    %v99 = vpop.permute.xlu0 %98
    %102 = vset.pattern.permute.xlu0 0
    %103 = vperm.xlu0 %102, %v53
    %v104 = vpop.permute.xlu0 %103
    %107 = vset.pattern.permute.xlu0 0
    %108 = vperm.xlu0 %107, %v54
    %v109 = vpop.permute.xlu0 %108
    %112 = vset.pattern.permute.xlu0 0
    %113 = vperm.xlu0 %112, %v55
    %v114 = vpop.permute.xlu0 %113
    %117 = vset.pattern.permute.xlu0 0
    %118 = vperm.xlu0 %117, %v56
    %v119 = vpop.permute.xlu0 %118
    %122 = vset.pattern.permute.xlu0 0
    %123 = vperm.xlu0 %122, %v57
    %v124 = vpop.permute.xlu0 %123
    %127 = vset.pattern.permute.xlu0 0
    %128 = vperm.xlu0 %127, %v58
    %v129 = vpop.permute.xlu0 %128
    %132 = vset.pattern.permute.xlu0 0
    %133 = vperm.xlu0 %132, %v59
    %v134 = vpop.permute.xlu0 %133
    %137 = vset.pattern.permute.xlu0 0
    %138 = vperm.xlu0 %137, %v60
    %v139 = vpop.permute.xlu0 %138
    %v157 = vunpack.c.l.b16 %v28
    %v158 = vunpack.c.l.b16 %v29
    %v159 = vunpack.c.l.b16 %v30
    %v160 = vunpack.c.l.b16 %v31
    %v161 = vunpack.c.l.b16 %v32
    %v162 = vunpack.c.l.b16 %v33
    %v163 = vunpack.c.l.b16 %v34
    %v164 = vunpack.c.l.b16 %v35
    %v165 = vunpack.c.l.b16 %v36
    %v166 = vunpack.c.l.b16 %v37
    %v167 = vunpack.c.l.b16 %v38
    %v168 = vunpack.c.l.b16 %v39
    %v169 = vunpack.c.l.b16 %v40
    %v170 = vunpack.c.l.b16 %v41
    %v171 = vunpack.c.l.b16 %v42
    %v172 = vunpack.c.l.b16 %v43
    %v173 = vpack.c.b16 %v158, %v157
    %v174 = vpack.c.b16 %v160, %v159
    %v175 = vpack.c.b16 %v162, %v161
    %v176 = vpack.c.b16 %v164, %v163
    %v177 = vpack.c.b16 %v166, %v165
    %v178 = vpack.c.b16 %v168, %v167
    %v179 = vpack.c.b16 %v170, %v169
    %v180 = vpack.c.b16 %v172, %v171
    %vm181 = vcmask 64512
    %v183 = vsel %vm181, %v173, 0
    %v186 = vsel %vm181, %v174, 0
    %v189 = vsel %vm181, %v175, 0
    %v192 = vsel %vm181, %v176, 0
    %v195 = vsel %vm181, %v177, 0
    %v198 = vsel %vm181, %v178, 0
    %v201 = vsel %vm181, %v179, 0
    %v204 = vsel %vm181, %v180, 0
    %vm206 = vcmask 1043456
    %v208 = vsel %vm206, %v44, 0
    %210 = vmatpush.bf16.msra.mxu0 0
    %211 = vmatpush.bf16.msra.mxu0 0
    %212 = vmatpush.bf16.msra.mxu0 0
    %213 = vmatpush.bf16.msra.mxu0 0
    %214 = vmatpush.bf16.msra.mxu0 0
    %215 = vmatpush.bf16.msra.mxu0 0
    %216 = vmatpush.bf16.msra.mxu0 0
    %217 = vmatpush.bf16.msra.mxu0 %v208
    %218 = vmatmul.bf16.gmra.mxu0 %v183
    %v219 = vpop.f32.mrf.mxu0
    %v220 = vadd.f32 %v64, %v219
    %v221 = vpop.f32.mrf.mxu0
    %v222 = vadd.f32 %v69, %v221
    %223 = vmatmul.bf16.gmra.mxu0 %v186
    %v224 = vpop.f32.mrf.mxu0
    %v225 = vadd.f32 %v74, %v224
    %v226 = vpop.f32.mrf.mxu0
    %v227 = vadd.f32 %v79, %v226
    %228 = vmatmul.bf16.gmra.mxu0 %v189
    %v229 = vpop.f32.mrf.mxu0
    %v230 = vadd.f32 %v84, %v229
    %v231 = vpop.f32.mrf.mxu0
    %v232 = vadd.f32 %v89, %v231
    %233 = vmatmul.bf16.gmra.mxu0 %v192
    %v234 = vpop.f32.mrf.mxu0
    %v235 = vadd.f32 %v94, %v234
    %v236 = vpop.f32.mrf.mxu0
    %v237 = vadd.f32 %v99, %v236
    %238 = vmatmul.bf16.gmra.mxu0 %v195
    %v239 = vpop.f32.mrf.mxu0
    %v240 = vadd.f32 %v104, %v239
    %v241 = vpop.f32.mrf.mxu0
    %v242 = vadd.f32 %v109, %v241
    %243 = vmatmul.bf16.gmra.mxu0 %v198
    %v244 = vpop.f32.mrf.mxu0
    %v245 = vadd.f32 %v114, %v244
    %v246 = vpop.f32.mrf.mxu0
    %v247 = vadd.f32 %v119, %v246
    %248 = vmatmul.bf16.gmra.mxu0 %v201
    %v249 = vpop.f32.mrf.mxu0
    %v250 = vadd.f32 %v124, %v249
    %v251 = vpop.f32.mrf.mxu0
    %v252 = vadd.f32 %v129, %v251
    %253 = vmatmul.bf16.gmra.mxu0 %v204
    %v254 = vpop.f32.mrf.mxu0
    %v255 = vadd.f32 %v134, %v254
    %v256 = vpop.f32.mrf.mxu0
    %v257 = vadd.f32 %v139, %v256
    %258 = vdwg.mxu0
    %v259 = vmax.f32 %v220, 0.0
    %v260 = vmax.f32 %v222, 0.0
    %v261 = vmax.f32 %v225, 0.0
    %v262 = vmax.f32 %v227, 0.0
    %v263 = vmax.f32 %v230, 0.0
    %v264 = vmax.f32 %v232, 0.0
    %v265 = vmax.f32 %v235, 0.0
    %v266 = vmax.f32 %v237, 0.0
    %v267 = vmax.f32 %v240, 0.0
    %v268 = vmax.f32 %v242, 0.0
    %v269 = vmax.f32 %v245, 0.0
    %v270 = vmax.f32 %v247, 0.0
    %v271 = vmax.f32 %v250, 0.0
    %v272 = vmax.f32 %v252, 0.0
    %v273 = vmax.f32 %v255, 0.0
    %v274 = vmax.f32 %v257, 0.0
    %v275 = vld [vmem:[%s3] sm:$0xf]
    %v276 = vld [vmem:[%s3 + $0x4] sm:$0xf]
    %v277 = vld [vmem:[%s3 + $0x8] sm:$0xf]
    %v278 = vld [vmem:[%s3 + $0xc] sm:$0xf]
    %v279 = vld [vmem:[%s3 + $0x10] sm:$0xf]
    %v280 = vld [vmem:[%s3 + $0x14] sm:$0xf]
    %v281 = vld [vmem:[%s3 + $0x18] sm:$0xf]
    %v282 = vld [vmem:[%s3 + $0x1c] sm:$0xf]
    %v283 = vpack.c.bf16 %v260, %v259
    %v284 = vpack.c.bf16 %v262, %v261
    %v285 = vpack.c.bf16 %v264, %v263
    %v286 = vpack.c.bf16 %v266, %v265
    %v287 = vpack.c.bf16 %v268, %v267
    %v288 = vpack.c.bf16 %v270, %v269
    %v289 = vpack.c.bf16 %v272, %v271
    %v290 = vpack.c.bf16 %v274, %v273
    %v291 = vld [vmem:[%s4] sm:$0xff]
    %v292 = vld [vmem:[%s4 + $0x8] sm:$0xff]
    %v293 = vld [vmem:[%s4 + $0x10] sm:$0xff]
    %v294 = vld [vmem:[%s4 + $0x18] sm:$0xff]
    %v295 = vld [vmem:[%s4 + $0x20] sm:$0xff]
    %v296 = vld [vmem:[%s4 + $0x28] sm:$0xff]
    %v297 = vld [vmem:[%s4 + $0x30] sm:$0xff]
    %v298 = vld [vmem:[%s4 + $0x38] sm:$0xff]
    %300 = vset.pattern.permute.xlu0 0
    %301 = vperm.xlu0 %300, %v291
    %v302 = vpop.permute.xlu0 %301
    %305 = vset.pattern.permute.xlu0 0
    %306 = vperm.xlu0 %305, %v292
    %v307 = vpop.permute.xlu0 %306
    %310 = vset.pattern.permute.xlu0 0
    %311 = vperm.xlu0 %310, %v293
    %v312 = vpop.permute.xlu0 %311
    %315 = vset.pattern.permute.xlu0 0
    %316 = vperm.xlu0 %315, %v294
    %v317 = vpop.permute.xlu0 %316
    %320 = vset.pattern.permute.xlu0 0
    %321 = vperm.xlu0 %320, %v295
    %v322 = vpop.permute.xlu0 %321
    %325 = vset.pattern.permute.xlu0 0
    %326 = vperm.xlu0 %325, %v296
    %v327 = vpop.permute.xlu0 %326
    %330 = vset.pattern.permute.xlu0 0
    %331 = vperm.xlu0 %330, %v297
    %v332 = vpop.permute.xlu0 %331
    %335 = vset.pattern.permute.xlu0 0
    %336 = vperm.xlu0 %335, %v298
    %v337 = vpop.permute.xlu0 %336
    %v347 = vunpack.c.l.b16 %v275
    %v348 = vunpack.c.l.b16 %v276
    %v349 = vunpack.c.l.b16 %v277
    %v350 = vunpack.c.l.b16 %v278
    %v351 = vunpack.c.l.b16 %v279
    %v352 = vunpack.c.l.b16 %v280
    %v353 = vunpack.c.l.b16 %v281
    %v354 = vunpack.c.l.b16 %v282
    %v355 = vpack.c.b16 %v348, %v347
    %v356 = vpack.c.b16 %v350, %v349
    %v357 = vpack.c.b16 %v352, %v351
    %v358 = vpack.c.b16 %v354, %v353
    %363 = vmatpush.bf16.msra.mxu0 %v290
    %364 = vmatpush.bf16.msra.mxu0 %v289
    %365 = vmatpush.bf16.msra.mxu0 %v288
    %366 = vmatpush.bf16.msra.mxu0 %v287
    %367 = vmatpush.bf16.msra.mxu0 %v286
    %368 = vmatpush.bf16.msra.mxu0 %v285
    %369 = vmatpush.bf16.msra.mxu0 %v284
    %370 = vmatpush.bf16.msra.mxu0 %v283
    %371 = vmatmul.bf16.gmra.mxu0 %v355
    %v372 = vpop.f32.mrf.mxu0
    %v373 = vadd.f32 %v302, %v372
    %v374 = vpop.f32.mrf.mxu0
    %v375 = vadd.f32 %v307, %v374
    %376 = vmatmul.bf16.gmra.mxu0 %v356
    %v377 = vpop.f32.mrf.mxu0
    %v378 = vadd.f32 %v312, %v377
    %v379 = vpop.f32.mrf.mxu0
    %v380 = vadd.f32 %v317, %v379
    %381 = vmatmul.bf16.gmra.mxu0 %v357
    %v382 = vpop.f32.mrf.mxu0
    %v383 = vadd.f32 %v322, %v382
    %v384 = vpop.f32.mrf.mxu0
    %v385 = vadd.f32 %v327, %v384
    %386 = vmatmul.bf16.gmra.mxu0 %v358
    %v387 = vpop.f32.mrf.mxu0
    %v388 = vadd.f32 %v332, %v387
    %v389 = vpop.f32.mrf.mxu0
    %v390 = vadd.f32 %v337, %v389
    %391 = vdwg.mxu0
    %v392 = vmax.f32 %v373, 0.0
    %v393 = vmax.f32 %v375, 0.0
    %v394 = vmax.f32 %v378, 0.0
    %v395 = vmax.f32 %v380, 0.0
    %v396 = vmax.f32 %v383, 0.0
    %v397 = vmax.f32 %v385, 0.0
    %v398 = vmax.f32 %v388, 0.0
    %v399 = vmax.f32 %v390, 0.0
    %v400 = vld [vmem:[%s5] sm:$0x3]
    %v401 = vpack.c.bf16 %v393, %v392
    %v402 = vpack.c.bf16 %v395, %v394
    %v403 = vpack.c.bf16 %v397, %v396
    %v404 = vpack.c.bf16 %v399, %v398
    %v405 = vld [vmem:[%s6] sm:$0xf]
    %407 = vset.pattern.permute.xlu0 0
    %408 = vperm.xlu0 %407, %v405
    %v409 = vpop.permute.xlu0 %408
    %vm411 = vcmask 523264
    %v413 = vsel %vm411, %v400, 0
    %415 = vmatpush.bf16.msra.mxu0 0
    %416 = vmatpush.bf16.msra.mxu0 0
    %417 = vmatpush.bf16.msra.mxu0 0
    %418 = vmatpush.bf16.msra.mxu0 0
    %419 = vmatpush.bf16.msra.mxu0 %v404
    %420 = vmatpush.bf16.msra.mxu0 %v403
    %421 = vmatpush.bf16.msra.mxu0 %v402
    %422 = vmatpush.bf16.msra.mxu0 %v401
    %423 = vmatmul.bf16.gmra.mxu0 %v413
    %v424 = vpop.f32.mrf.mxu0
    %v425 = vadd.f32 %v409, %v424
    %v426 = vpop.f32.mrf.mxu0
    %427 = vdwg.mxu0
    %428 = vst [vmem:[#allocation2] sm:$0xf] %v425
    // Predicated region
    $region30: #{rgba_forward_slab.1} parent=1 // pred_check
      _
    $region31: #{rgba_forward_slab.1} parent=1 // pred_check_branch
      %430 = sbr.rel (0) target = $region33
    $region32: #{rgba_forward_slab.1} parent=1 // pred_region
      %432 = vsyncadd [#allocation3], 0
      %s434 = sshll.u32 [#allocation2], 4
      %s435 = int_to_ptr.vmem [resolvable:$true] %s434
      %s436 = sshll.u32 %s7, 4
      %s437 = int_to_ptr.hbm [resolvable:$true] %s436
      %439 = dma.vmem_to_hbm [thread:$0]  %s435, 64, %s437, [#allocation3]
    $region33: #{rgba_forward_slab.1} parent=1 // pred_fallthru
      _
    // Predicated region
    $region34: #{rgba_forward_slab.1} parent=1 // pred_check
      _
    $region35: #{rgba_forward_slab.1} parent=1 // pred_check_branch
      %441 = sbr.rel (0) target = $region37
    $region36: #{rgba_forward_slab.1} parent=1 // pred_region
      %443 = dma.done [#allocation3], 64
    $region37: #{rgba_forward_slab.1} parent=1 // pred_fallthru
      _
    %444 = vsyncpa [#allocation3], 1

</llo_original>
